<compile_context>
chip_gen: v7x
topology: tpu7x:2x2x1
jax: 0.10.0
libtpu: 0.0.40
codegen_flags: <defaults>
</compile_context>

<pallas_src>
import functools

import jax
import jax.numpy as jnp
from jax import lax
from jax.experimental import pallas as pl
from jax.experimental.pallas import tpu as pltpu

ALPHA = 0.15
GAMMA = 1.0
LANES = 128
TILE_BYTES = 2 * 1024 * 1024  # ~2 MiB of each input per pipeline buffer


def _focal_terms(x, t, gamma):
    """Per-element focal loss WITHOUT alpha (folded into the finalize).

    Numerically-stable BCE-with-logits, same formulation as torch:
      bce = max(x, 0) - x*t + log1p(exp(-|x|));  pt = exp(-bce);  loss = (1-pt)**gamma * bce
    """
    x = x.astype(jnp.float32)
    t = t.astype(jnp.float32)
    bce = jnp.maximum(x, 0.0) - x * t + jnp.log1p(jnp.exp(-jnp.abs(x)))
    pt = jnp.exp(-bce)
    one_minus_pt = 1.0 - pt

    g = float(gamma)
    if g.is_integer() and 0 <= int(g) <= 4:
        n = int(g)
        if n == 0:
            return bce
        w = one_minus_pt
        for _ in range(n - 1):
            w = w * one_minus_pt
    else:
        # Guard against tiny negative rounding before the non-integer pow.
        w = jnp.power(jnp.maximum(one_minus_pt, 0.0), g)
    return w * bce


def _focal_sum_kernel(x_ref, t_ref, o_ref, *, gamma, row_tile):
    """Accumulate the per-tile focal-loss sum into a lane-dense (8, 128) output slab."""
    @pl.when(pl.program_id(1) == 0)
    def _():
        o_ref[...] = jnp.zeros_like(o_ref)

    f = _focal_terms(x_ref[...], t_ref[...], gamma)
    # Pure-VPU fold of (row_tile, 128) into (8, 128); no cross-lane (XLU) reduce in-kernel.
    o_ref[...] += f.reshape(row_tile // 8, 8, LANES).sum(axis=0)


def _num_tensorcores_per_chip():
    try:
        kind = jax.devices()[0].device_kind.lower()
    except Exception:
        return 1
    return 2 if "v7" in kind else 1


def focal_loss(inputs, targets, alpha=ALPHA, gamma=GAMMA, reduction="mean"):
    """Focal loss matching FocalLoss(alpha, gamma, reduction) for 'mean'/'sum'."""
    assert inputs.shape == targets.shape
    if reduction not in ("mean", "sum"):
        # TODO(synk): 'none' reduction (per-element map) is returned via plain JAX,
        # not through the Pallas reduction kernel.
        return alpha * _focal_terms(inputs, targets, gamma)

    total_elems = int(inputs.size)
    xf = inputs.reshape(-1)
    tf = targets.reshape(-1)

    itemsizes = (jnp.dtype(inputs.dtype).itemsize, jnp.dtype(targets.dtype).itemsize)
    sublane = max(8, 32 // min(itemsizes))  # bf16 inputs need 16-row sublane multiples
    max_row_tile = max(
        sublane, (TILE_BYTES // (LANES * max(itemsizes))) // sublane * sublane
    )

    full_rows = total_elems // LANES
    num_splits = _num_tensorcores_per_chip()
    if full_rows // max(num_splits, 1) < sublane:
        num_splits = 1  # too small to feed two TensorCores

    rows_per_split = full_rows // num_splits
    row_tile = min(max_row_tile, (rows_per_split // sublane) * sublane)

    if row_tile == 0:
        # Input too small for even one tile: compute everything with plain JAX.
        total = jnp.sum(_focal_terms(xf, tf, gamma))
    else:
        steps_per_split = rows_per_split // row_tile
        main_rows = num_splits * steps_per_split * row_tile
        main_elems = main_rows * LANES

        if main_elems == total_elems:
            # Aligned case: pure bitcast reshape, no extra HBM traffic.
            x_main = xf.reshape(main_rows, LANES)
            t_main = tf.reshape(main_rows, LANES)
        else:
            x_main = lax.slice(xf, (0,), (main_elems,)).reshape(main_rows, LANES)
            t_main = lax.slice(tf, (0,), (main_elems,)).reshape(main_rows, LANES)

        kernel = functools.partial(_focal_sum_kernel, gamma=gamma, row_tile=row_tile)

        def in_map(c, i):
            return (c * steps_per_split + i, 0)

        first_sem = (
            getattr(pltpu, "CORE_PARALLEL", "parallel") if num_splits > 1 else "arbitrary"
        )

        partials = pl.pallas_call(
            kernel,
            out_shape=jax.ShapeDtypeStruct((num_splits, 8, LANES), jnp.float32),
            grid_spec=pltpu.PrefetchScalarGridSpec(
                num_scalar_prefetch=0,
                grid=(num_splits, steps_per_split),
                in_specs=[
                    pl.BlockSpec((row_tile, LANES), in_map),
                    pl.BlockSpec((row_tile, LANES), in_map),
                ],
                # Output-resident (8,128) accumulator per split; leading dim squeezed.
                out_specs=pl.BlockSpec((None, 8, LANES), lambda c, i: (c, 0, 0)),
            ),
            compiler_params=pltpu.CompilerParams(
                # Outer axis shards across TensorCores on v7x; inner axis is the
                # sequential reduction over row tiles.
                dimension_semantics=(first_sem, "arbitrary"),
            ),
        )(x_main, t_main)

        total = jnp.sum(partials)
        if main_elems != total_elems:
            # Small ragged tail (< num_splits*row_tile*128 elements) in plain JAX.
            total = total + jnp.sum(
                _focal_terms(xf[main_elems:], tf[main_elems:], gamma)
            )

    total = jnp.float32(alpha) * total
    if reduction == "mean":
        return total / jnp.float32(total_elems)
    return total


def focal_loss_ref(inputs, targets, alpha=ALPHA, gamma=GAMMA):
    x = inputs.astype(jnp.float32)
    t = targets.astype(jnp.float32)
    bce = jnp.maximum(x, 0.0) - x * t + jnp.log1p(jnp.exp(-jnp.abs(x)))
    pt = jnp.exp(-bce)
    return jnp.mean(alpha * (1.0 - pt) ** gamma * bce)


if __name__ == "__main__":
    key = jax.random.PRNGKey(0)
    k1, k2, k3, k4 = jax.random.split(key, 4)

    # NCHW logits + binary targets (aligned case: 2048 elements = 16 lane-rows).
    x = jax.random.normal(k1, (2, 4, 16, 16), dtype=jnp.float32)
    targets = (jax.random.uniform(k2, (2, 4, 16, 16)) > 0.5).astype(jnp.float32)
    out = jax.block_until_ready(focal_loss(x, targets))
    ref = focal_loss_ref(x, targets)
    assert jnp.allclose(out, ref, rtol=1e-5, atol=1e-6), (out, ref)

    # Non-128-divisible size exercises the kernel-prefix + JAX-tail path,
    # plus the integer-gamma (gamma=2) specialization.
    x2 = jax.random.normal(k3, (3, 5, 7, 11), dtype=jnp.float32)
    t2 = (jax.random.uniform(k4, (3, 5, 7, 11)) > 0.5).astype(jnp.float32)
    out2 = jax.block_until_ready(focal_loss(x2, t2, alpha=0.25, gamma=2.0))
    ref2 = focal_loss_ref(x2, t2, alpha=0.25, gamma=2.0)
    assert jnp.allclose(out2, ref2, rtol=1e-5, atol=1e-6), (out2, ref2)

    print("KERNEL_OK")
</pallas_src>

<mosaic_0001>
module attributes {stable_mosaic.version = 11 : i64} {
  func.func @_focal_sum_kernel(%arg0: i32, %arg1: i32, %arg2: memref<16x128xf32, #tpu.memory_space<vmem>>, %arg3: memref<16x128xf32, #tpu.memory_space<vmem>>, %arg4: memref<1x8x128xf32, #tpu.memory_space<vmem>>) attributes {dimension_semantics = [#tpu.dimension_semantics<arbitrary>, #tpu.dimension_semantics<arbitrary>], iteration_bounds = array<i64: 1, 1>, scalar_prefetch = 0 : i64, scratch_operands = 0 : i64, tpu.core_type = #tpu.core_type<tc>, window_params = [{transform_indices = @transform_0, window_bounds = array<i64: 16, 128>}, {transform_indices = @transform_1, window_bounds = array<i64: 16, 128>}, {transform_indices = @transform_2, window_bounds = array<i64: 1, 8, 128>}]} {
    %c0_i32 = arith.constant 0 : i32
    %0 = arith.cmpi eq, %arg1, %c0_i32 : i32
    %1 = arith.extui %0 : i1 to i32
    %c0_i32_0 = arith.constant 0 : i32
    %2 = arith.cmpi ne, %1, %c0_i32_0 : i32
    scf.if %2 {
      %cst_14 = arith.constant 0.000000e+00 : f32
      %29 = vector.broadcast %cst_14 : f32 to vector<8x128xf32>
      %c0_15 = arith.constant 0 : index
      %c0_16 = arith.constant 0 : index
      %c0_17 = arith.constant 0 : index
      %30 = vector.load %arg4[%c0_15, %c0_16, %c0_17] : memref<1x8x128xf32, #tpu.memory_space<vmem>>, vector<1x8x128xf32>
      %31 = vector.shape_cast %30 : vector<1x8x128xf32> to vector<8x128xf32>
      %32 = vector.shape_cast %29 : vector<8x128xf32> to vector<1x8x128xf32>
      tpu.vector_store %arg4[%c0_15, %c0_16, %c0_17], %32 {strides = array<i32>} : memref<1x8x128xf32, #tpu.memory_space<vmem>>, vector<1x8x128xf32>,
    } else {
    }
    %c0 = arith.constant 0 : index
    %c0_1 = arith.constant 0 : index
    %3 = vector.load %arg2[%c0, %c0_1] : memref<16x128xf32, #tpu.memory_space<vmem>>, vector<16x128xf32>
    %c0_2 = arith.constant 0 : index
    %c0_3 = arith.constant 0 : index
    %4 = vector.load %arg3[%c0_2, %c0_3] : memref<16x128xf32, #tpu.memory_space<vmem>>, vector<16x128xf32>
    %cst = arith.constant 0.000000e+00 : f32
    %5 = vector.broadcast %cst : f32 to vector<16x128xf32>
    %6 = arith.maximumf %3, %5 : vector<16x128xf32>
    %7 = arith.mulf %3, %4 : vector<16x128xf32>
    %8 = arith.subf %6, %7 : vector<16x128xf32>
    %9 = math.absf %3 : vector<16x128xf32>
    %cst_4 = arith.constant 0.000000e+00 : f32
    %10 = vector.broadcast %cst_4 : f32 to vector<16x128xf32>
    %11 = arith.subf %10, %9 : vector<16x128xf32>
    %12 = math.exp %11 : vector<16x128xf32>
    %13 = math.log1p %12 : vector<16x128xf32>
    %14 = arith.addf %8, %13 : vector<16x128xf32>
    %cst_5 = arith.constant 0.000000e+00 : f32
    %15 = vector.broadcast %cst_5 : f32 to vector<16x128xf32>
    %16 = arith.subf %15, %14 : vector<16x128xf32>
    %17 = math.exp %16 : vector<16x128xf32>
    %cst_6 = arith.constant 1.000000e+00 : f32
    %18 = vector.broadcast %cst_6 : f32 to vector<16x128xf32>
    %19 = arith.subf %18, %17 : vector<16x128xf32>
    %20 = arith.mulf %19, %14 : vector<16x128xf32>
    %c0_7 = arith.constant 0 : index
    %c0_8 = arith.constant 0 : index
    %c0_9 = arith.constant 0 : index
    %21 = vector.load %arg4[%c0_7, %c0_8, %c0_9] : memref<1x8x128xf32, #tpu.memory_space<vmem>>, vector<1x8x128xf32>
    %22 = vector.shape_cast %21 : vector<1x8x128xf32> to vector<8x128xf32>
    %23 = vector.shape_cast %20 : vector<16x128xf32> to vector<2x8x128xf32>
    %cst_10 = arith.constant dense<0.000000e+00> : vector<8x128xf32>
    %24 = vector.multi_reduction <add>, %23, %cst_10 [0] : vector<2x8x128xf32> to vector<8x128xf32>
    %25 = arith.addf %22, %24 : vector<8x128xf32>
    %c0_11 = arith.constant 0 : index
    %c0_12 = arith.constant 0 : index
    %c0_13 = arith.constant 0 : index
    %26 = vector.load %arg4[%c0_11, %c0_12, %c0_13] : memref<1x8x128xf32, #tpu.memory_space<vmem>>, vector<1x8x128xf32>
    %27 = vector.shape_cast %26 : vector<1x8x128xf32> to vector<8x128xf32>
    %28 = vector.shape_cast %25 : vector<8x128xf32> to vector<1x8x128xf32>
    tpu.vector_store %arg4[%c0_11, %c0_12, %c0_13], %28 {strides = array<i32>} : memref<1x8x128xf32, #tpu.memory_space<vmem>>, vector<1x8x128xf32>,
    return
  }
  func.func @transform_0(%arg0: i32, %arg1: i32) -> (i32, i32) {
    %c1_i32 = arith.constant 1 : i32
    %0 = arith.muli %arg0, %c1_i32 : i32
    %1 = arith.addi %0, %arg1 : i32
    %c0_i32 = arith.constant 0 : i32
    %c0_i32_0 = arith.constant 0 : i32
    return %1, %c0_i32 : i32, i32
  }
  func.func @transform_1(%arg0: i32, %arg1: i32) -> (i32, i32) {
    %c1_i32 = arith.constant 1 : i32
    %0 = arith.muli %arg0, %c1_i32 : i32
    %1 = arith.addi %0, %arg1 : i32
    %c0_i32 = arith.constant 0 : i32
    %c0_i32_0 = arith.constant 0 : i32
    return %1, %c0_i32 : i32, i32
  }
  func.func @transform_2(%arg0: i32, %arg1: i32) -> (i32, i32, i32) {
    %c0_i32 = arith.constant 0 : i32
    %c0_i32_0 = arith.constant 0 : i32
    %c0_i32_1 = arith.constant 0 : i32
    return %arg0, %c0_i32, %c0_i32_0 : i32, i32, i32
  }
}

</mosaic_0001>

<llo_original>
// kernel: tpu_custom_call.1
$region0: #{tpu_custom_call.1}
  #allocation0 [shape = 'u32[]', space=smem, size = 0x4, offset = 0x4, fixed_abs, tag = 'smem constant byte address 0x4 - core index']
  #allocation1 [shape = 'u32[144,128]{1,0:T(1,128)}', space=vmem, size = 0x12000, scoped, tag = 'internal scratch']
  %s0 = inlined_call_operand.hbm [shape: f32[16,128], index: 0, kind: input, shape index: {}]
  %s1 = inlined_call_operand.hbm [shape: f32[16,128], index: 1, kind: input, shape index: {}]
  %s2 = inlined_call_operand.hbm [shape: f32[1,8,128], index: 2, kind: output, shape index: {}]
  %s3 = sld [smem:[#allocation0]]
  $region30: #{tpu_custom_call.1} parent=0
    _
  %s5 = ssub.s32 1, %s3
  %s6 = scalar_select 0, %s5, %s3
  $region1: #{tpu_custom_call.1} parent=0
    #allocation2 [shape = 'u8[8192]{0}', space=vmem, size = 0x2000, scoped, tag = 'input window, operand 0, single buffered']
    #allocation3 [shape = 's32[1]{0}', space=sflag, size = 0x4, scoped, tag = 'scoped memory for tpu_custom_call.1']
    #allocation4 [shape = 's32[1]{0}', space=sflag, size = 0x4, scoped, tag = 'scoped memory for tpu_custom_call.1']
    #allocation5 [shape = 'u8[8192]{0}', space=vmem, size = 0x2000, scoped, tag = 'input window, operand 1, single buffered']
    #allocation6 [shape = 's32[1]{0}', space=sflag, size = 0x4, scoped, tag = 'scoped memory for tpu_custom_call.1']
    #allocation7 [shape = 'u8[4096]{0}', space=vmem, size = 0x1000, scoped, tag = 'output window, operand 0, single buffered']
    %7 = vsyncpa [#allocation3], 0
    %8 = vsyncpa [#allocation6], 0
    %9 = vsyncpa [#allocation4], 0
    // Predicated region
    $region2: #{tpu_custom_call.1} parent=1 // pred_check
      _
    $region3: #{tpu_custom_call.1} parent=1 // pred_check_branch
      %11 = sbr.rel (0) target = $region5
    $region4: #{tpu_custom_call.1} parent=1 // pred_region
      %s12 = sadd.s32 0, 0
      %s13 = smul.u32 2, %s12
      %s15 = ssub.s32 256, 256
      %16 = vsyncadd [#allocation3], %s15
      %s17 = smul.addr %s13, 128
      %s18 = scalar_lea.hbm %s0, %s17
      %s19 = sshll.u32 [#allocation2], 4
      %s20 = int_to_ptr.vmem [resolvable:$true] %s19
      %25 = dma.hbm_to_vmem [thread:$0]  %s18, 256, %s20, [#allocation3], 128, 128, 8
    $region5: #{tpu_custom_call.1} parent=1 // pred_fallthru
      _
    // Predicated region
    $region6: #{tpu_custom_call.1} parent=1 // pred_check
      _
    $region7: #{tpu_custom_call.1} parent=1 // pred_check_branch
      %27 = sbr.rel (0) target = $region9
    $region8: #{tpu_custom_call.1} parent=1 // pred_region
      %s28 = sadd.s32 0, 0
      %s29 = smul.u32 2, %s28
      %s31 = ssub.s32 256, 256
      %32 = vsyncadd [#allocation6], %s31
      %s33 = smul.addr %s29, 128
      %s34 = scalar_lea.hbm %s1, %s33
      %s35 = sshll.u32 [#allocation5], 4
      %s36 = int_to_ptr.vmem [resolvable:$true] %s35
      %41 = dma.hbm_to_vmem [thread:$0]  %s34, 256, %s36, [#allocation6], 128, 128, 8
    $region9: #{tpu_custom_call.1} parent=1 // pred_fallthru
      _
    // Predicated region
    $region10: #{tpu_custom_call.1} parent=1 // pred_check
      _
    $region11: #{tpu_custom_call.1} parent=1 // pred_check_branch
      %43 = sbr.rel (0) target = $region13
    $region12: #{tpu_custom_call.1} parent=1 // pred_region
      %44 = dma.done [#allocation3], 256
    $region13: #{tpu_custom_call.1} parent=1 // pred_fallthru
      _
    // Predicated region
    $region14: #{tpu_custom_call.1} parent=1 // pred_check
      _
    $region15: #{tpu_custom_call.1} parent=1 // pred_check_branch
      %46 = sbr.rel (0) target = $region17
    $region16: #{tpu_custom_call.1} parent=1 // pred_region
      %47 = dma.done [#allocation6], 256
    $region17: #{tpu_custom_call.1} parent=1 // pred_fallthru
      _
    %s48 = sadd.s32 0, 0
    %s49 = smul.u32 2, %s48
    %s50 = sadd.s32 0, 0
    %s51 = smul.u32 2, %s50
    %p52 = scmp.eq.s32.totalorder 0, 0
    // Predicated region
    $region18: #{tpu_custom_call.1} parent=1 // pred_check
      %p53 = pneg %p52
    $region19: #{tpu_custom_call.1} parent=1 // pred_check_branch
      %55 = sbr.rel (%p53) target = $region21
    $region20: #{tpu_custom_call.1} parent=1 // pred_region
      %56 = vst [vmem:[#allocation7] sm:$0xff] 0.0
    $region21: #{tpu_custom_call.1} parent=1 // pred_fallthru
      _
    %v57 = vld [vmem:[#allocation2] sm:$0xff]
    %v58 = vld [vmem:[#allocation2 + $0x8] sm:$0xff]
    %v59 = vld [vmem:[#allocation5] sm:$0xff]
    %v60 = vld [vmem:[#allocation5 + $0x8] sm:$0xff]
    %v61 = vmax.f32 %v57, 0.0
    %v62 = vmax.f32 %v58, 0.0
    %v63 = vmul.f32 %v57, %v59
    %v64 = vmul.f32 %v58, %v60
    %v65 = vsub.f32 %v61, %v63
    %v66 = vsub.f32 %v62, %v64
    %v67 = vand.u32 2147483647, %v57
    %v68 = vand.u32 2147483647, %v58
    %v69 = vsub.f32 0.0, %v67
    %v70 = vsub.f32 0.0, %v68
    %v71 = vmul.f32 %v69, 1.442695
    %v72 = vpow.pop %v71
    %v73 = vmul.f32 %v70, 1.442695
    %v74 = vpow.pop %v73
    %v75 = vadd.f32 %v72, 1.0
    %v76 = vlog2.pop %v75
    %v77 = vmul.f32 %v76, 0.6931472
    %v78 = vmul.f32 -0.5, %v72
    %v79 = vadd.f32 %v78, 1.0
    %v80 = vmul.f32 %v79, %v72
    %v81 = vand.u32 2147483647, %v72
    %vm82 = vcmp.lt.f32.partialorder %v81, 0.0004427343
    %v83 = vsel %vm82, %v80, %v77
    %v84 = vadd.f32 %v74, 1.0
    %v85 = vlog2.pop %v84
    %v86 = vmul.f32 %v85, 0.6931472
    %v87 = vmul.f32 -0.5, %v74
    %v88 = vadd.f32 %v87, 1.0
    %v89 = vmul.f32 %v88, %v74
    %v90 = vand.u32 2147483647, %v74
    %vm91 = vcmp.lt.f32.partialorder %v90, 0.0004427343
    %v92 = vsel %vm91, %v89, %v86
    %v93 = vadd.f32 %v65, %v83
    %v94 = vadd.f32 %v66, %v92
    %v95 = vsub.f32 0.0, %v93
    %v96 = vsub.f32 0.0, %v94
    %v97 = vmul.f32 %v95, 1.442695
    %v98 = vpow.pop %v97
    %v99 = vmul.f32 %v96, 1.442695
    %v100 = vpow.pop %v99
    %v101 = vsub.f32 1.0, %v98
    %v102 = vsub.f32 1.0, %v100
    %v103 = vmul.f32 %v101, %v93
    %v104 = vmul.f32 %v102, %v94
    %v105 = vld [vmem:[#allocation7] sm:$0xff]
    %v106 = vadd.f32 %v103, %v104
    %v107 = vadd.f32 %v105, %v106
    %108 = vst [vmem:[#allocation7] sm:$0xff] %v107
    // Predicated region
    $region22: #{tpu_custom_call.1} parent=1 // pred_check
      _
    $region23: #{tpu_custom_call.1} parent=1 // pred_check_branch
      %110 = sbr.rel (0) target = $region25
    $region24: #{tpu_custom_call.1} parent=1 // pred_region
      %s112 = ssub.s32 128, 128
      %113 = vsyncadd [#allocation4], %s112
      %s115 = sshll.u32 [#allocation7], 4
      %s116 = int_to_ptr.vmem [resolvable:$true] %s115
      %118 = dma.vmem_to_hbm [thread:$0]  %s116, 128, %s2, [#allocation4]
    $region25: #{tpu_custom_call.1} parent=1 // pred_fallthru
      _
    // Predicated region
    $region26: #{tpu_custom_call.1} parent=1 // pred_check
      _
    $region27: #{tpu_custom_call.1} parent=1 // pred_check_branch
      %120 = sbr.rel (0) target = $region29
    $region28: #{tpu_custom_call.1} parent=1 // pred_region
      %121 = dma.done [#allocation4], 128
    $region29: #{tpu_custom_call.1} parent=1 // pred_fallthru
      _
    %122 = vsyncpa [#allocation3], 1
    %123 = vsyncpa [#allocation6], 1
    %124 = vsyncpa [#allocation4], 1

</llo_original>
